<compile_context>
chip_gen: v7x
topology: tpu7x:2x2x1
jax: 0.10.0
libtpu: 0.0.40
codegen_flags: <defaults>
</compile_context>

<pallas_src>
import jax
import jax.numpy as jnp
from jax import lax
from jax.experimental import pallas as pl
from jax.experimental.pallas import tpu as pltpu


def _round_up(x: int, m: int) -> int:
    return ((x + m - 1) // m) * m


# ---------------------------------------------------------------------------
# Pallas kernel: one LGConv propagation layer + fused layer-sum accumulation.
#   x_new  = A_tile @ X          (bf16 MXU, f32 accumulate)
#   acc'   = acc + x_new         (f32 running sum of layer outputs)
# ---------------------------------------------------------------------------
def _lgconv_layer_kernel(a_ref, x_ref, acc_ref, x_out_ref, acc_out_ref):
    x_new = jnp.dot(a_ref[...], x_ref[...], preferred_element_type=jnp.float32)
    x_out_ref[...] = x_new.astype(x_out_ref.dtype)   # bf16 feed for the next layer
    acc_out_ref[...] = acc_ref[...] + x_new          # f32 layer sum


def lgconv_layer(a_bf16: jax.Array, x_bf16: jax.Array, acc_f32: jax.Array, *, tm: int):
    """a_bf16: (n_pad, n_pad) bf16; x_bf16: (n_pad, d_pad) bf16; acc_f32: (n_pad, d_pad) f32."""
    n_pad, d_pad = x_bf16.shape
    grid = (n_pad // tm,)
    return pl.pallas_call(
        _lgconv_layer_kernel,
        out_shape=(
            jax.ShapeDtypeStruct((n_pad, d_pad), jnp.bfloat16),
            jax.ShapeDtypeStruct((n_pad, d_pad), jnp.float32),
        ),
        grid_spec=pltpu.PrefetchScalarGridSpec(
            num_scalar_prefetch=0,
            grid=grid,
            in_specs=[
                # A row tile, streamed & double-buffered across the grid.
                pl.BlockSpec((tm, n_pad), lambda i: (i, 0)),
                # Full X block, constant index map -> fetched once, stays resident.
                pl.BlockSpec((n_pad, d_pad), lambda i: (0, 0)),
                # Running layer-sum, row tile.
                pl.BlockSpec((tm, d_pad), lambda i: (i, 0)),
            ],
            out_specs=(
                pl.BlockSpec((tm, d_pad), lambda i: (i, 0)),
                pl.BlockSpec((tm, d_pad), lambda i: (i, 0)),
            ),
        ),
        compiler_params=pltpu.CompilerParams(
            dimension_semantics=("parallel",),       # row tiles independent -> v7x megacore
            vmem_limit_bytes=48 * 1024 * 1024,       # explicit scoped VMEM (safe on v5e/v6e/v7x)
        ),
    )(a_bf16, x_bf16, acc_f32)


def lgconv_stack(a_bf16: jax.Array, x0_f32: jax.Array, layer_num: int, *, tm: int) -> jax.Array:
    """Computes (1/(L+1)^2) * sum_{l=0..L} A_norm^l @ X0 on padded shapes."""
    x = x0_f32.astype(jnp.bfloat16)
    acc = x0_f32.astype(jnp.float32)
    for _ in range(layer_num):
        x, acc = lgconv_layer(a_bf16, x, acc, tm=tm)
    scale = 1.0 / float((layer_num + 1) * (layer_num + 1))
    return acc * scale


# ---------------------------------------------------------------------------
# Glue: dense normalized adjacency from edge_index (PyG gcn_norm,
# add_self_loops=False, flow='source_to_target': out[col] += norm * x[row]).
# Built padded to n_pad and cast to bf16 for the MXU / HBM-traffic win.
# ---------------------------------------------------------------------------
def build_norm_adjacency(edge_index: jax.Array, n_pad: int) -> jax.Array:
    row = edge_index[0]  # source
    col = edge_index[1]  # target
    ones = jnp.ones(row.shape[0], dtype=jnp.float32)
    deg = jnp.zeros((n_pad,), jnp.float32).at[col].add(ones)
    deg_inv_sqrt = jnp.where(deg > 0, lax.rsqrt(jnp.maximum(deg, 1e-12)), 0.0)
    norm = deg_inv_sqrt[row] * deg_inv_sqrt[col]
    a = jnp.zeros((n_pad, n_pad), jnp.float32).at[col, row].add(norm)
    return a.astype(jnp.bfloat16)


# ---------------------------------------------------------------------------
# DIG forward
# ---------------------------------------------------------------------------
class DIGParams:
    def __init__(self, key, geo_embed_dim, int_embed_dim, user_num, item_num):
        k1, k2, k3, k4 = jax.random.split(key, 4)
        std = 0.01
        self.user_int = std * jax.random.normal(k1, (user_num, int_embed_dim), jnp.float32)
        self.user_geo = std * jax.random.normal(k2, (user_num, geo_embed_dim), jnp.float32)
        self.item_int = std * jax.random.normal(k3, (item_num, int_embed_dim), jnp.float32)
        self.item_geo = std * jax.random.normal(k4, (item_num, geo_embed_dim), jnp.float32)


def dig_forward(params: DIGParams, edge_index: jax.Array, layer_num: int,
                user_num: int, item_num: int, *, row_tile: int = 256):
    n = user_num + item_num
    d_int = params.user_int.shape[1]
    d_geo = params.user_geo.shape[1]
    d_tot = d_int + d_geo
    d_pad = _round_up(max(d_tot, 128), 128)     # lane-dense output (unmasked stores)

    # Row-tile / padding selection: single tile for small graphs, 256-row tiles otherwise.
    if n <= row_tile:
        n_pad = _round_up(n, 8)
        tm = n_pad
    else:
        n_pad = _round_up(n, row_tile)
        tm = row_tile

    a_norm = build_norm_adjacency(edge_index, n_pad)

    # Fuse int (D=32) and geo (D=16) embeddings along the lane axis, pad to 128.
    int_emb0 = jnp.concatenate([params.user_int, params.item_int], axis=0)
    geo_emb0 = jnp.concatenate([params.user_geo, params.item_geo], axis=0)
    x0 = jnp.concatenate([int_emb0, geo_emb0], axis=1)                 # (n, d_tot) f32
    x0 = jnp.pad(x0, ((0, n_pad - n), (0, d_pad - d_tot)))             # (n_pad, d_pad)

    result = lgconv_stack(a_norm, x0, layer_num, tm=tm)                # (n_pad, d_pad) f32

    int_result = result[:n, :d_int]
    geo_result = result[:n, d_int:d_tot]
    return (int_result[:user_num], int_result[user_num:],
            geo_result[:user_num], geo_result[user_num:])


# ---------------------------------------------------------------------------
# Pure-JAX f32 reference (mirrors the PyTorch DIG.forward semantics)
# ---------------------------------------------------------------------------
def dig_forward_ref(params, edge_index, layer_num, user_num, item_num):
    n = user_num + item_num
    row = edge_index[0]
    col = edge_index[1]
    ones = jnp.ones(row.shape[0], dtype=jnp.float32)
    deg = jnp.zeros((n,), jnp.float32).at[col].add(ones)
    deg_inv_sqrt = jnp.where(deg > 0, lax.rsqrt(jnp.maximum(deg, 1e-12)), 0.0)
    norm = deg_inv_sqrt[row] * deg_inv_sqrt[col]
    a_norm = jnp.zeros((n, n), jnp.float32).at[col, row].add(norm)

    def run(x0):
        embs = [x0]
        x = x0
        for _ in range(layer_num):
            x = a_norm @ x
            embs.append(x)
        # 1/(L+1) * mean over (L+1) stacked layers == sum / (L+1)^2
        return (1.0 / (layer_num + 1)) * jnp.mean(jnp.stack(embs, axis=1), axis=1)

    int_result = run(jnp.concatenate([params.user_int, params.item_int], axis=0))
    geo_result = run(jnp.concatenate([params.user_geo, params.item_geo], axis=0))
    return (int_result[:user_num], int_result[user_num:],
            geo_result[:user_num], geo_result[user_num:])


if __name__ == "__main__":
    geo_embed_dim = 16
    int_embed_dim = 32
    layer_num = 2
    user_num = 8
    item_num = 8
    n_nodes = user_num + item_num

    key = jax.random.PRNGKey(0)
    pkey, ekey = jax.random.split(key)
    params = DIGParams(pkey, geo_embed_dim, int_embed_dim, user_num, item_num)

    # Deterministic bipartite interaction graph (user<->item, both directions).
    num_interactions = 24
    users = jax.random.randint(ekey, (num_interactions,), 0, user_num)
    items = jax.random.randint(jax.random.fold_in(ekey, 1), (num_interactions,),
                               user_num, n_nodes)
    src = jnp.concatenate([users, items])
    dst = jnp.concatenate([items, users])
    edge_index = jnp.stack([src, dst], axis=0).astype(jnp.int32)  # (2, 2E)

    outs = dig_forward(params, edge_index, layer_num, user_num, item_num)
    outs = jax.block_until_ready(outs)

    refs = dig_forward_ref(params, edge_index, layer_num, user_num, item_num)
    # bf16 A/X on the matmul path (f32 accumulation) -> loosened tolerance vs f32 reference.
    for o, r in zip(outs, refs):
        assert o.shape == r.shape
        assert jnp.allclose(o, r, atol=5e-4, rtol=2e-2), float(jnp.max(jnp.abs(o - r)))

    print("KERNEL_OK")
</pallas_src>

<mosaic_0001>
module attributes {stable_mosaic.version = 11 : i64} {
  func.func @_lgconv_layer_kernel(%arg0: i32, %arg1: memref<16x16xbf16, #tpu.memory_space<vmem>>, %arg2: memref<16x128xbf16, #tpu.memory_space<vmem>>, %arg3: memref<16x128xf32, #tpu.memory_space<vmem>>, %arg4: memref<16x128xbf16, #tpu.memory_space<vmem>>, %arg5: memref<16x128xf32, #tpu.memory_space<vmem>>) attributes {dimension_semantics = [#tpu.dimension_semantics<parallel>], iteration_bounds = array<i64: 1>, scalar_prefetch = 0 : i64, scratch_operands = 0 : i64, tpu.core_type = #tpu.core_type<tc>, window_params = [{transform_indices = @transform_0, window_bounds = array<i64: 16, 16>}, {pipeline_mode = #tpu.pipeline_mode<synchronous>, transform_indices = @transform_1, window_bounds = array<i64: 16, 128>}, {transform_indices = @transform_2, window_bounds = array<i64: 16, 128>}, {transform_indices = @transform_3, window_bounds = array<i64: 16, 128>}, {transform_indices = @transform_4, window_bounds = array<i64: 16, 128>}]} {
    %c0 = arith.constant 0 : index
    %c0_0 = arith.constant 0 : index
    %0 = vector.load %arg1[%c0, %c0_0] : memref<16x16xbf16, #tpu.memory_space<vmem>>, vector<16x16xbf16>
    %c0_1 = arith.constant 0 : index
    %c0_2 = arith.constant 0 : index
    %1 = vector.load %arg2[%c0_1, %c0_2] : memref<16x128xbf16, #tpu.memory_space<vmem>>, vector<16x128xbf16>
    %cst = arith.constant dense<0.000000e+00> : vector<16x128xf32>
    %2 = tpu.matmul %0, %1, %cst {dimension_numbers = #tpu.dot_dimension_numbers<[1], [0], [0], [1], [0, 0, 1, 1], [], []>} : vector<16x16xbf16>, vector<16x128xbf16>, vector<16x128xf32> -> vector<16x128xf32>
    %3 = arith.truncf %2 : vector<16x128xf32> to vector<16x128xbf16>
    %c0_3 = arith.constant 0 : index
    %c0_4 = arith.constant 0 : index
    %4 = vector.load %arg4[%c0_3, %c0_4] : memref<16x128xbf16, #tpu.memory_space<vmem>>, vector<16x128xbf16>
    tpu.vector_store %arg4[%c0_3, %c0_4], %3 {strides = array<i32>} : memref<16x128xbf16, #tpu.memory_space<vmem>>, vector<16x128xbf16>,
    %c0_5 = arith.constant 0 : index
    %c0_6 = arith.constant 0 : index
    %5 = vector.load %arg3[%c0_5, %c0_6] : memref<16x128xf32, #tpu.memory_space<vmem>>, vector<16x128xf32>
    %6 = arith.addf %5, %2 : vector<16x128xf32>
    %c0_7 = arith.constant 0 : index
    %c0_8 = arith.constant 0 : index
    %7 = vector.load %arg5[%c0_7, %c0_8] : memref<16x128xf32, #tpu.memory_space<vmem>>, vector<16x128xf32>
    tpu.vector_store %arg5[%c0_7, %c0_8], %6 {strides = array<i32>} : memref<16x128xf32, #tpu.memory_space<vmem>>, vector<16x128xf32>,
    return
  }
  func.func @transform_0(%arg0: i32) -> (i32, i32) {
    %c0_i32 = arith.constant 0 : i32
    %c0_i32_0 = arith.constant 0 : i32
    return %arg0, %c0_i32 : i32, i32
  }
  func.func @transform_1(%arg0: i32) -> (i32, i32) {
    %c0_i32 = arith.constant 0 : i32
    %c0_i32_0 = arith.constant 0 : i32
    %c0_i32_1 = arith.constant 0 : i32
    return %c0_i32, %c0_i32_0 : i32, i32
  }
  func.func @transform_2(%arg0: i32) -> (i32, i32) {
    %c0_i32 = arith.constant 0 : i32
    %c0_i32_0 = arith.constant 0 : i32
    return %arg0, %c0_i32 : i32, i32
  }
  func.func @transform_3(%arg0: i32) -> (i32, i32) {
    %c0_i32 = arith.constant 0 : i32
    %c0_i32_0 = arith.constant 0 : i32
    return %arg0, %c0_i32 : i32, i32
  }
  func.func @transform_4(%arg0: i32) -> (i32, i32) {
    %c0_i32 = arith.constant 0 : i32
    %c0_i32_0 = arith.constant 0 : i32
    return %arg0, %c0_i32 : i32, i32
  }
}

</mosaic_0001>

<llo_original>
// kernel: tpu_custom_call.1
$region0: #{tpu_custom_call.1}
  #allocation0 [shape = 'u32[]', space=smem, size = 0x4, offset = 0x4, fixed_abs, tag = 'smem constant byte address 0x4 - core index']
  #allocation1 [shape = 'u32[144,128]{1,0:T(1,128)}', space=vmem, size = 0x12000, scoped, tag = 'internal scratch']
  %s0 = inlined_call_operand.hbm [shape: bf16[16,16], index: 0, kind: input, shape index: {}]
  %s1 = inlined_call_operand.hbm [shape: bf16[16,128], index: 1, kind: input, shape index: {}]
  %s2 = inlined_call_operand.hbm [shape: f32[16,128], index: 2, kind: input, shape index: {}]
  %s3 = inlined_call_operand.hbm [shape: bf16[16,128], index: 3, kind: output, shape index: {0}]
  %s4 = inlined_call_operand.hbm [shape: f32[16,128], index: 4, kind: output, shape index: {1}]
  %5 = xla_tuple %s3, %s4
  %s6 = sld [smem:[#allocation0]]
  $region42: #{tpu_custom_call.1} parent=0
    _
  %s8 = ssub.s32 1, %s6
  %s9 = scalar_select 0, %s8, %s6
  $region1: #{tpu_custom_call.1} parent=0
    #allocation2 [shape = 'u8[4096]{0}', space=vmem, size = 0x1000, scoped, tag = 'input window, operand 0, single buffered']
    #allocation3 [shape = 's32[1]{0}', space=sflag, size = 0x4, scoped, tag = 'scoped memory for tpu_custom_call.1']
    #allocation4 [shape = 's32[1]{0}', space=sflag, size = 0x4, scoped, tag = 'scoped memory for tpu_custom_call.1']
    #allocation5 [shape = 'u8[4096]{0}', space=vmem, size = 0x1000, scoped, tag = 'input window, operand 1, single buffered']
    #allocation6 [shape = 's32[1]{0}', space=sflag, size = 0x4, scoped, tag = 'scoped memory for tpu_custom_call.1']
    #allocation7 [shape = 'u8[8192]{0}', space=vmem, size = 0x2000, scoped, tag = 'input window, operand 2, single buffered']
    #allocation8 [shape = 'u8[4096]{0}', space=vmem, size = 0x1000, scoped, tag = 'output window, operand 0, single buffered']
    #allocation9 [shape = 'u8[8192]{0}', space=vmem, size = 0x2000, scoped, tag = 'output window, operand 1, single buffered']
    #allocation10 [shape = 's32[1]{0}', space=sflag, size = 0x4, scoped, tag = 'scoped memory for tpu_custom_call.1']
    %10 = vsyncpa [#allocation3], 0
    %11 = vsyncpa [#allocation6], 0
    %12 = vsyncpa [#allocation4], 0
    %13 = vsyncpa [#allocation10], 0
    // Predicated region
    $region2: #{tpu_custom_call.1} parent=1 // pred_check
      _
    $region3: #{tpu_custom_call.1} parent=1 // pred_check_branch
      %15 = sbr.rel (0) target = $region5
    $region4: #{tpu_custom_call.1} parent=1 // pred_region
      %s17 = ssub.s32 128, 128
      %18 = vsyncadd [#allocation3], %s17
      %s19 = sshll.u32 [#allocation2], 4
      %s20 = int_to_ptr.vmem [resolvable:$true] %s19
      %25 = dma.hbm_to_vmem [thread:$0]  %s0, 128, %s20, [#allocation3], 64, 64, 4
    $region5: #{tpu_custom_call.1} parent=1 // pred_fallthru
      _
    // Predicated region
    $region6: #{tpu_custom_call.1} parent=1 // pred_check
      _
    $region7: #{tpu_custom_call.1} parent=1 // pred_check_branch
      %27 = sbr.rel (0) target = $region9
    $region8: #{tpu_custom_call.1} parent=1 // pred_region
      %s29 = ssub.s32 128, 128
      %30 = vsyncadd [#allocation6], %s29
      %s31 = sshll.u32 [#allocation5], 4
      %s32 = int_to_ptr.vmem [resolvable:$true] %s31
      %37 = dma.hbm_to_vmem [thread:$0]  %s1, 128, %s32, [#allocation6], 64, 64, 4
    $region9: #{tpu_custom_call.1} parent=1 // pred_fallthru
      _
    // Predicated region
    $region10: #{tpu_custom_call.1} parent=1 // pred_check
      _
    $region11: #{tpu_custom_call.1} parent=1 // pred_check_branch
      %39 = sbr.rel (0) target = $region13
    $region12: #{tpu_custom_call.1} parent=1 // pred_region
      %s41 = ssub.s32 256, 256
      %42 = vsyncadd [#allocation6], %s41
      %s43 = sshll.u32 [#allocation7], 4
      %s44 = int_to_ptr.vmem [resolvable:$true] %s43
      %49 = dma.hbm_to_vmem [thread:$0]  %s2, 256, %s44, [#allocation6], 128, 128, 8
    $region13: #{tpu_custom_call.1} parent=1 // pred_fallthru
      _
    // Predicated region
    $region14: #{tpu_custom_call.1} parent=1 // pred_check
      _
    $region15: #{tpu_custom_call.1} parent=1 // pred_check_branch
      %51 = sbr.rel (0) target = $region17
    $region16: #{tpu_custom_call.1} parent=1 // pred_region
      %52 = dma.done [#allocation3], 128
    $region17: #{tpu_custom_call.1} parent=1 // pred_fallthru
      _
    // Predicated region
    $region18: #{tpu_custom_call.1} parent=1 // pred_check
      _
    $region19: #{tpu_custom_call.1} parent=1 // pred_check_branch
      %54 = sbr.rel (0) target = $region21
    $region20: #{tpu_custom_call.1} parent=1 // pred_region
      %55 = dma.done [#allocation6], 128
    $region21: #{tpu_custom_call.1} parent=1 // pred_fallthru
      _
    // Predicated region
    $region22: #{tpu_custom_call.1} parent=1 // pred_check
      _
    $region23: #{tpu_custom_call.1} parent=1 // pred_check_branch
      %57 = sbr.rel (0) target = $region25
    $region24: #{tpu_custom_call.1} parent=1 // pred_region
      %58 = dma.done [#allocation6], 256
    $region25: #{tpu_custom_call.1} parent=1 // pred_fallthru
      _
    %v60 = vld [vmem:[#allocation2] sm:$0xf]
    %v61 = vld [vmem:[#allocation2 + $0x4] sm:$0xf]
    %v62 = vld [vmem:[#allocation5] sm:$0xf]
    %v63 = vld [vmem:[#allocation5 + $0x4] sm:$0xf]
    %v66 = vunpack.c.l.b16 %v60
    %v67 = vunpack.c.l.b16 %v61
    %v68 = vpack.c.b16 %v67, %v66
    %v71 = vunpack.c.l.b16 %v62
    %v72 = vunpack.c.l.b16 %v63
    %v73 = vpack.c.b16 %v72, %v71
    %vm75 = vcmask 130048
    %v77 = vsel %vm75, %v68, 0
    %79 = vmatprep.subr.bf16.mxu0 0
    %80 = vmatpush1.bf16.msra.mxu0 %v73
    %81 = vmatprep.subr.bf16.mxu0 0
    %82 = vmatpush1.bf16.msra.mxu0 0
    %83 = vmatprep.subr.bf16.mxu0 0
    %84 = vmatpush1.bf16.msra.mxu0 0
    %85 = vmatprep.subr.bf16.mxu0 0
    %86 = vmatpush1.bf16.msra.mxu0 0
    %87 = vmatprep.subr.bf16.mxu0 0
    %88 = vmatpush1.bf16.msra.mxu0 0
    %89 = vmatprep.subr.bf16.mxu0 0
    %90 = vmatpush1.bf16.msra.mxu0 0
    %91 = vmatprep.subr.bf16.mxu0 0
    %92 = vmatpush1.bf16.msra.mxu0 0
    %93 = vmatprep.subr.bf16.mxu0 0
    %94 = vmatpush1.bf16.msra.mxu0 0
    %95 = vmatprep.subr.bf16.mxu0 0
    %96 = vmatpush1.bf16.msra.mxu0 0
    %97 = vmatprep.subr.bf16.mxu0 0
    %98 = vmatpush1.bf16.msra.mxu0 0
    %99 = vmatprep.subr.bf16.mxu0 0
    %100 = vmatpush1.bf16.msra.mxu0 0
    %101 = vmatprep.subr.bf16.mxu0 0
    %102 = vmatpush1.bf16.msra.mxu0 0
    %103 = vmatprep.subr.bf16.mxu0 0
    %104 = vmatpush1.bf16.msra.mxu0 0
    %105 = vmatprep.subr.bf16.mxu0 0
    %106 = vmatpush1.bf16.msra.mxu0 0
    %107 = vmatprep.subr.bf16.mxu0 0
    %108 = vmatpush1.bf16.msra.mxu0 0
    %109 = vmatprep.subr.bf16.mxu0 0
    %110 = vmatpush1.bf16.msra.mxu0 0
    %111 = vmatprep.mubr.bf16.mxu0 0
    %112 = vmatmul.mubr.bf16.gmra.mrb[0].mxu0 %v77
    %v113 = vpop.f32.mrb[0].mxu0
    %v114 = vadd.f32 0.0, %v113
    %v115 = vpop.f32.mrb[0].mxu0
    %v116 = vpop.f32.mrb[0].mxu0
    %v117 = vadd.f32 0.0, %v116
    %v118 = vpop.f32.mrb[0].mxu0
    %119 = vdwg.mxu0
    %v120 = vpack.c.bf16 %v117, %v114
    %v122 = vunpack.c.l.b16 %v120
    %v123 = vunpack.c.h.b16 %v120
    %v124 = vpack.c.b16 %v122, %v122
    %v125 = vpack.c.b16 %v123, %v123
    %128 = vst [vmem:[#allocation8] sm:$0xf] %v124
    %129 = vst [vmem:[#allocation8 + $0x4] sm:$0xf] %v125
    %v130 = vld [vmem:[#allocation7] sm:$0xff]
    %v131 = vld [vmem:[#allocation7 + $0x8] sm:$0xff]
    %v132 = vadd.f32 %v130, %v114
    %v133 = vadd.f32 %v131, %v117
    %134 = vst [vmem:[#allocation9] sm:$0xff] %v132
    %135 = vst [vmem:[#allocation9 + $0x8] sm:$0xff] %v133
    // Predicated region
    $region26: #{tpu_custom_call.1} parent=1 // pred_check
      _
    $region27: #{tpu_custom_call.1} parent=1 // pred_check_branch
      %137 = sbr.rel (0) target = $region29
    $region28: #{tpu_custom_call.1} parent=1 // pred_region
      %s139 = ssub.s32 128, 128
      %140 = vsyncadd [#allocation4], %s139
      %s141 = sshll.u32 [#allocation8], 4
      %s142 = int_to_ptr.vmem [resolvable:$true] %s141
      %147 = dma.vmem_to_hbm [thread:$0]  %s142, 128, %s3, [#allocation4], 64, 64, 4
    $region29: #{tpu_custom_call.1} parent=1 // pred_fallthru
      _
    // Predicated region
    $region30: #{tpu_custom_call.1} parent=1 // pred_check
      _
    $region31: #{tpu_custom_call.1} parent=1 // pred_check_branch
      %149 = sbr.rel (0) target = $region33
    $region32: #{tpu_custom_call.1} parent=1 // pred_region
      %s151 = ssub.s32 256, 256
      %152 = vsyncadd [#allocation10], %s151
      %s153 = sshll.u32 [#allocation9], 4
      %s154 = int_to_ptr.vmem [resolvable:$true] %s153
      %159 = dma.vmem_to_hbm [thread:$0]  %s154, 256, %s4, [#allocation10], 128, 128, 8
    $region33: #{tpu_custom_call.1} parent=1 // pred_fallthru
      _
    // Predicated region
    $region34: #{tpu_custom_call.1} parent=1 // pred_check
      _
    $region35: #{tpu_custom_call.1} parent=1 // pred_check_branch
      %161 = sbr.rel (0) target = $region37
    $region36: #{tpu_custom_call.1} parent=1 // pred_region
      %162 = dma.done [#allocation4], 128
    $region37: #{tpu_custom_call.1} parent=1 // pred_fallthru
      _
    // Predicated region
    $region38: #{tpu_custom_call.1} parent=1 // pred_check
      _
    $region39: #{tpu_custom_call.1} parent=1 // pred_check_branch
      %164 = sbr.rel (0) target = $region41
    $region40: #{tpu_custom_call.1} parent=1 // pred_region
      %165 = dma.done [#allocation10], 256
    $region41: #{tpu_custom_call.1} parent=1 // pred_fallthru
      _
    %166 = vsyncpa [#allocation3], 1
    %167 = vsyncpa [#allocation6], 1
    %168 = vsyncpa [#allocation4], 1
    %169 = vsyncpa [#allocation10], 1

</llo_original>
